<compile_context>
chip_gen: v5e
topology: v5e:2x2
jax: 0.10.0
libtpu: 0.0.40
codegen_flags: <defaults>
</compile_context>

<pallas_src>
import functools

import jax
import jax.numpy as jnp
from jax import lax
from jax.experimental import pallas as pl
from jax.experimental.pallas import tpu as pltpu

_LANES = 128
_SUBLANES = 8


def _cdiv(a, b):
    return -(-a // b)


def _round_up(x, m):
    return ((x + m - 1) // m) * m


def _int_pow(x, g):
    """x ** g for small non-negative integer g via VPU multiplies."""
    if g == 0:
        return jnp.ones_like(x)
    r = x
    for _ in range(g - 1):
        r = r * x
    return r


def _focal_elementwise(pt, tg, alpha, gamma):
    """Focal term, computed in f32 on the VPU/EUP."""
    pt = pt.astype(jnp.float32)
    tg = tg.astype(jnp.float32)
    one_m_pt = 1.0 - pt
    log_pt = jnp.log(pt)
    log_omp = jnp.log(one_m_pt)
    if float(gamma).is_integer() and 0.0 <= gamma <= 8.0:
        g = int(gamma)
        pt_pow = _int_pow(pt, g)
        omp_pow = _int_pow(one_m_pt, g)
    else:
        # Reuse the logs already needed for the loss: x**g = exp(g * log x).
        pt_pow = jnp.exp(gamma * log_pt)
        omp_pow = jnp.exp(gamma * log_omp)
    # F_loss = -alpha*(1-pt)**g * t * log(pt) - (1-alpha)*pt**g * (1-t) * log(1-pt)
    return (-alpha * omp_pow * tg * log_pt
            - (1.0 - alpha) * pt_pow * (1.0 - tg) * log_omp)


def _focal_kernel(p_ref, t_ref, out_ref, *, alpha, gamma, rows_valid,
                  block_rows, chunk_rows, blocks_per_split, needs_mask):
    """Accumulate one (block_rows, 128) tile of focal loss into out_ref (8,128)."""
    s = pl.program_id(0)            # parallel split (megacore on v7x)
    i = pl.program_id(1)            # reduction axis within the split

    @pl.when(i == 0)
    def _():
        out_ref[...] = jnp.zeros_like(out_ref)

    n_chunks = block_rows // chunk_rows
    # Unclamped global row of this block's first row (index_map may clamp the
    # actual DMA block; the mask below uses the unclamped position).
    blk_row0 = (s * blocks_per_split + i) * block_rows

    def accumulate(masked):
        def body(c, acc):
            r0 = pl.multiple_of(c * chunk_rows, _SUBLANES)
            loss = _focal_elementwise(p_ref[pl.ds(r0, chunk_rows), :],
                                      t_ref[pl.ds(r0, chunk_rows), :],
                                      alpha, gamma)
            if masked:
                # Single small iota; jnp.where (select) so NaNs from garbage
                # rows in partial blocks cannot leak into the accumulator.
                row_ids = lax.broadcasted_iota(jnp.int32, (chunk_rows, 1), 0)
                valid = (blk_row0 + r0 + row_ids) < rows_valid
                loss = jnp.where(valid, loss, 0.0)
            # Fold to one vreg (8,128) with pure elementwise adds (no XLU).
            return acc + loss.reshape(chunk_rows // _SUBLANES, _SUBLANES,
                                      _LANES).sum(axis=0)

        acc = lax.fori_loop(0, n_chunks, body,
                            jnp.zeros((_SUBLANES, _LANES), jnp.float32),
                            unroll=min(n_chunks, 4))
        out_ref[...] += acc

    if needs_mask:
        # Only blocks at/after the first partial block need the mask.
        full_blocks = rows_valid // block_rows
        is_tail = (s * blocks_per_split + i) >= full_blocks

        @pl.when(jnp.logical_not(is_tail))
        def _():
            accumulate(masked=False)

        @pl.when(is_tail)
        def _():
            accumulate(masked=True)
    else:
        accumulate(masked=False)


def _default_n_splits():
    # Two-way "parallel" split only pays off on chips with 2 TensorCores per
    # device (v7x); on single-TC v5e/v6e it only inflates padding granularity.
    try:
        kind = jax.devices()[0].device_kind.lower()
    except Exception:
        return 1
    return 2 if "v7" in kind else 1


def focal_loss(inputs, targets, *, alpha=0.6, gamma=2.0, reduction="mean",
               tile_rows=1024, n_splits=None):
    """Focal loss with 'mean' (default) or 'sum' reduction.

    inputs/targets: same shape; inputs are probabilities in (0, 1), any float
    dtype (bf16 inputs halve HBM traffic; the kernel upcasts on the VPU)."""
    assert inputs.shape == targets.shape
    if reduction not in ("mean", "sum"):
        # TODO(synk): reduction='none' (elementwise output) not implemented.
        raise NotImplementedError("only 'mean' and 'sum' reductions supported")

    n_elems = int(inputs.size)
    if n_elems == 0:
        raise ValueError("focal_loss on empty input")

    p_flat = inputs.reshape(-1)
    t_flat = targets.reshape(-1)

    # The kernel processes the largest (kernel_rows, 128) slab with kernel_rows
    # a multiple of 8; the small flat remainder is handled below with plain jnp.
    kernel_rows = (n_elems // (_SUBLANES * _LANES)) * _SUBLANES
    n_kernel = kernel_rows * _LANES

    total = jnp.zeros((), jnp.float32)

    if n_kernel:
        # No-op when n_kernel == n_elems (aligned inputs, the common case);
        # otherwise the prefix slice may materialize one copy (still far
        # cheaper than padding both inputs up to a block multiple).
        p2 = p_flat[:n_kernel].reshape(kernel_rows, _LANES)
        t2 = t_flat[:n_kernel].reshape(kernel_rows, _LANES)

        block_rows = max(_SUBLANES,
                         min(_round_up(int(tile_rows), _SUBLANES), kernel_rows))
        # chunk_rows must divide block_rows and be a multiple of 8.
        chunk_rows = next(c for c in (32, 16, 8) if block_rows % c == 0)

        nblocks = _cdiv(kernel_rows, block_rows)
        splits = int(n_splits) if n_splits is not None else _default_n_splits()
        splits = max(1, min(splits, nblocks))
        blocks_per_split = _cdiv(nblocks, splits)
        needs_mask = splits * blocks_per_split * block_rows > kernel_rows

        def in_index(s_, i_):
            # Clamp over-covered grid steps to the last real block; their
            # contribution is zeroed by the in-kernel mask.
            return (jnp.minimum(s_ * blocks_per_split + i_, nblocks - 1), 0)

        kernel = functools.partial(
            _focal_kernel,
            alpha=float(alpha), gamma=float(gamma),
            rows_valid=kernel_rows, block_rows=block_rows,
            chunk_rows=chunk_rows, blocks_per_split=blocks_per_split,
            needs_mask=bool(needs_mask),
        )

        in_bytes = p2.dtype.itemsize + t2.dtype.itemsize
        partials = pl.pallas_call(
            kernel,
            out_shape=jax.ShapeDtypeStruct((splits * _SUBLANES, _LANES),
                                           jnp.float32),
            grid_spec=pltpu.PrefetchScalarGridSpec(
                num_scalar_prefetch=0,
                grid=(splits, blocks_per_split),
                in_specs=[
                    pl.BlockSpec((block_rows, _LANES), in_index),
                    pl.BlockSpec((block_rows, _LANES), in_index),
                ],
                out_specs=pl.BlockSpec((_SUBLANES, _LANES),
                                       lambda s_, i_: (s_, 0)),
            ),
            compiler_params=pltpu.CompilerParams(
                dimension_semantics=("parallel", "arbitrary"),
                vmem_limit_bytes=32 * 1024 * 1024,
            ),
            cost_estimate=pl.CostEstimate(
                flops=12 * n_kernel,
                transcendentals=2 * n_kernel,
                bytes_accessed=n_kernel * in_bytes
                + splits * _SUBLANES * _LANES * 4,
            ),
        )(p2, t2)
        total = total + jnp.sum(partials)

    if n_kernel < n_elems:
        # Flat remainder (< 8*128 + 128 elements): plain jnp, negligible cost.
        tail = _focal_elementwise(p_flat[n_kernel:], t_flat[n_kernel:],
                                  float(alpha), float(gamma))
        total = total + jnp.sum(tail)

    if reduction == "mean":
        total = total / jnp.float32(n_elems)
    return total


def focal_loss_ref(inputs, targets, alpha=0.6, gamma=2.0, reduction="mean"):
    pt = inputs.astype(jnp.float32)
    tg = targets.astype(jnp.float32)
    loss = (-alpha * (1.0 - pt) ** gamma * tg * jnp.log(pt)
            - (1.0 - alpha) * pt ** gamma * (1.0 - tg) * jnp.log(1.0 - pt))
    return jnp.mean(loss) if reduction == "mean" else jnp.sum(loss)


def _make_inputs(key, shape):
    k1, k2 = jax.random.split(key)
    eps = 1e-4
    p = jax.random.uniform(k1, shape, jnp.float32, minval=eps, maxval=1.0 - eps)
    t = (jax.random.uniform(k2, shape, jnp.float32) > 0.5).astype(jnp.float32)
    return p, t


if __name__ == "__main__":
    key = jax.random.PRNGKey(0)
    ks = jax.random.split(key, 3)

    # 1) NCHW-shaped demo (aligned fast path: zero pad / zero copy).
    p, t = _make_inputs(ks[0], (2, 4, 16, 16))
    out = jax.block_until_ready(focal_loss(p, t, alpha=0.6, gamma=2.0))
    ref = focal_loss_ref(p, t)
    assert jnp.allclose(out, ref, rtol=1e-5, atol=1e-6), (out, ref)

    # 2) Forced split + partial block + clamped over-covered step (masked path).
    p, t = _make_inputs(ks[1], (40, 128))
    out = jax.block_until_ready(
        focal_loss(p, t, alpha=0.6, gamma=2.0, tile_rows=16, n_splits=2))
    ref = focal_loss_ref(p, t)
    assert jnp.allclose(out, ref, rtol=1e-5, atol=1e-6), (out, ref)

    # 3) Misaligned element count (kernel slab + plain-jnp flat remainder).
    p, t = _make_inputs(ks[2], (3, 5, 7, 11))
    out = jax.block_until_ready(focal_loss(p, t, alpha=0.6, gamma=2.0))
    ref = focal_loss_ref(p, t)
    assert jnp.allclose(out, ref, rtol=1e-5, atol=1e-6), (out, ref)

    print("KERNEL_OK")
</pallas_src>

<mosaic_0001>
module attributes {stable_mosaic.version = 11 : i64} {
  func.func @_focal_kernel(%arg0: i32, %arg1: i32, %arg2: memref<16x128xf32, #tpu.memory_space<vmem>>, %arg3: memref<16x128xf32, #tpu.memory_space<vmem>>, %arg4: memref<8x128xf32, #tpu.memory_space<vmem>>) attributes {dimension_semantics = [#tpu.dimension_semantics<parallel>, #tpu.dimension_semantics<arbitrary>], iteration_bounds = array<i64: 1, 1>, scalar_prefetch = 0 : i64, scratch_operands = 0 : i64, tpu.core_type = #tpu.core_type<tc>, window_params = [{transform_indices = @transform_0, window_bounds = array<i64: 16, 128>}, {transform_indices = @transform_1, window_bounds = array<i64: 16, 128>}, {transform_indices = @transform_2, window_bounds = array<i64: 8, 128>}]} {
    %c0_i32 = arith.constant 0 : i32
    %0 = arith.cmpi eq, %arg1, %c0_i32 : i32
    %1 = arith.extui %0 : i1 to i32
    %c0_i32_0 = arith.constant 0 : i32
    %2 = arith.cmpi ne, %1, %c0_i32_0 : i32
    scf.if %2 {
      %cst_12 = arith.constant 0.000000e+00 : f32
      %33 = vector.broadcast %cst_12 : f32 to vector<8x128xf32>
      %c0_13 = arith.constant 0 : index
      %c0_14 = arith.constant 0 : index
      %34 = vector.load %arg4[%c0_13, %c0_14] : memref<8x128xf32, #tpu.memory_space<vmem>>, vector<8x128xf32>
      tpu.vector_store %arg4[%c0_13, %c0_14], %33 {strides = array<i32>} : memref<8x128xf32, #tpu.memory_space<vmem>>, vector<8x128xf32>,
    } else {
    }
    %cst = arith.constant 0.000000e+00 : f32
    %3 = vector.broadcast %cst : f32 to vector<8x128xf32>
    %c0_i32_1 = arith.constant 0 : i32
    %c16_i32 = arith.constant 16 : i32
    %4 = arith.muli %c0_i32_1, %c16_i32 : i32
    %5 = tpu.assume_multiple %4, 8 : i32
    %6 = arith.index_cast %5 : i32 to index
    %c0 = arith.constant 0 : index
    %7 = vector.load %arg2[%6, %c0] : memref<16x128xf32, #tpu.memory_space<vmem>>, vector<16x128xf32>
    %8 = arith.index_cast %5 : i32 to index
    %c0_2 = arith.constant 0 : index
    %9 = vector.load %arg3[%8, %c0_2] : memref<16x128xf32, #tpu.memory_space<vmem>>, vector<16x128xf32>
    %cst_3 = arith.constant 1.000000e+00 : f32
    %10 = vector.broadcast %cst_3 : f32 to vector<16x128xf32>
    %11 = arith.subf %10, %7 : vector<16x128xf32>
    %12 = math.log %7 : vector<16x128xf32>
    %13 = math.log %11 : vector<16x128xf32>
    %14 = arith.mulf %7, %7 : vector<16x128xf32>
    %15 = arith.mulf %11, %11 : vector<16x128xf32>
    %cst_4 = arith.constant -6.000000e-01 : f32
    %16 = vector.broadcast %cst_4 : f32 to vector<16x128xf32>
    %17 = arith.mulf %16, %15 : vector<16x128xf32>
    %18 = arith.mulf %17, %9 : vector<16x128xf32>
    %19 = arith.mulf %18, %12 : vector<16x128xf32>
    %cst_5 = arith.constant 4.000000e-01 : f32
    %20 = vector.broadcast %cst_5 : f32 to vector<16x128xf32>
    %21 = arith.mulf %20, %14 : vector<16x128xf32>
    %cst_6 = arith.constant 1.000000e+00 : f32
    %22 = vector.broadcast %cst_6 : f32 to vector<16x128xf32>
    %23 = arith.subf %22, %9 : vector<16x128xf32>
    %24 = arith.mulf %21, %23 : vector<16x128xf32>
    %25 = arith.mulf %24, %13 : vector<16x128xf32>
    %26 = arith.subf %19, %25 : vector<16x128xf32>
    %27 = vector.shape_cast %26 : vector<16x128xf32> to vector<2x8x128xf32>
    %cst_7 = arith.constant dense<0.000000e+00> : vector<8x128xf32>
    %28 = vector.multi_reduction <add>, %27, %cst_7 [0] : vector<2x8x128xf32> to vector<8x128xf32>
    %29 = arith.addf %3, %28 : vector<8x128xf32>
    %c1_i32 = arith.constant 1 : i32
    %c0_8 = arith.constant 0 : index
    %c0_9 = arith.constant 0 : index
    %30 = vector.load %arg4[%c0_8, %c0_9] : memref<8x128xf32, #tpu.memory_space<vmem>>, vector<8x128xf32>
    %31 = arith.addf %30, %29 : vector<8x128xf32>
    %c0_10 = arith.constant 0 : index
    %c0_11 = arith.constant 0 : index
    %32 = vector.load %arg4[%c0_10, %c0_11] : memref<8x128xf32, #tpu.memory_space<vmem>>, vector<8x128xf32>
    tpu.vector_store %arg4[%c0_10, %c0_11], %31 {strides = array<i32>} : memref<8x128xf32, #tpu.memory_space<vmem>>, vector<8x128xf32>,
    return
  }
  func.func @transform_0(%arg0: i32, %arg1: i32) -> (i32, i32) {
    %c1_i32 = arith.constant 1 : i32
    %0 = arith.muli %arg0, %c1_i32 : i32
    %1 = arith.addi %0, %arg1 : i32
    %c0_i32 = arith.constant 0 : i32
    %2 = arith.minsi %1, %c0_i32 : i32
    %c0_i32_0 = arith.constant 0 : i32
    %c0_i32_1 = arith.constant 0 : i32
    return %2, %c0_i32_0 : i32, i32
  }
  func.func @transform_1(%arg0: i32, %arg1: i32) -> (i32, i32) {
    %c1_i32 = arith.constant 1 : i32
    %0 = arith.muli %arg0, %c1_i32 : i32
    %1 = arith.addi %0, %arg1 : i32
    %c0_i32 = arith.constant 0 : i32
    %2 = arith.minsi %1, %c0_i32 : i32
    %c0_i32_0 = arith.constant 0 : i32
    %c0_i32_1 = arith.constant 0 : i32
    return %2, %c0_i32_0 : i32, i32
  }
  func.func @transform_2(%arg0: i32, %arg1: i32) -> (i32, i32) {
    %c0_i32 = arith.constant 0 : i32
    %c0_i32_0 = arith.constant 0 : i32
    return %arg0, %c0_i32 : i32, i32
  }
}

</mosaic_0001>

<llo_original>
// kernel: tpu_custom_call.1
$region0: #{tpu_custom_call.1}
  #allocation0 [shape = 'u32[]', space=smem, size = 0x4, offset = 0x4, fixed_abs, tag = 'smem constant byte address 0x4 - core index']
  #allocation1 [shape = 'u32[72,128]{1,0:T(1,128)}', space=vmem, size = 0x9000, scoped, tag = 'internal scratch']
  %s0 = inlined_call_operand.hbm [shape: f32[16,128], index: 0, kind: input, shape index: {}]
  %s1 = inlined_call_operand.hbm [shape: f32[16,128], index: 1, kind: input, shape index: {}]
  %s2 = inlined_call_operand.hbm [shape: f32[8,128], index: 2, kind: output, shape index: {}]
  %s3 = sld [smem:[#allocation0]]
  $region30: #{tpu_custom_call.1} parent=0
    _
  %s5 = ssub.s32 1, %s3
  %s6 = scalar_select 0, %s5, %s3
  $region1: #{tpu_custom_call.1} parent=0
    #allocation2 [shape = 'u8[8192]{0}', space=vmem, size = 0x2000, scoped, tag = 'input window, operand 0, single buffered']
    #allocation3 [shape = 's32[1]{0}', space=sflag, size = 0x4, scoped, tag = 'scoped memory for tpu_custom_call.1']
    #allocation4 [shape = 's32[1]{0}', space=sflag, size = 0x4, scoped, tag = 'scoped memory for tpu_custom_call.1']
    #allocation5 [shape = 'u8[8192]{0}', space=vmem, size = 0x2000, scoped, tag = 'input window, operand 1, single buffered']
    #allocation6 [shape = 's32[1]{0}', space=sflag, size = 0x4, scoped, tag = 'scoped memory for tpu_custom_call.1']
    #allocation7 [shape = 'u8[4096]{0}', space=vmem, size = 0x1000, scoped, tag = 'output window, operand 0, single buffered']
    %7 = vsyncpa [#allocation3], 0
    %8 = vsyncpa [#allocation6], 0
    %9 = vsyncpa [#allocation4], 0
    // Predicated region
    $region2: #{tpu_custom_call.1} parent=1 // pred_check
      _
    $region3: #{tpu_custom_call.1} parent=1 // pred_check_branch
      %11 = sbr.rel (0) target = $region5
    $region4: #{tpu_custom_call.1} parent=1 // pred_region
      %s12 = sadd.s32 0, 0
      %p13 = scmp.lt.s32.totalorder %s12, 0
      %s14 = scalar_select %p13, %s12, 0
      %s15 = smul.u32 2, %s14
      %17 = vsyncadd [#allocation3], 0
      %s18 = smul.addr %s15, 8
      %s19 = scalar_lea.hbm %s0, %s18
      %s20 = sshll.u32 %s19, 4
      %s21 = int_to_ptr.hbm [resolvable:$true] %s20
      %s22 = sshll.u32 [#allocation2], 4
      %s23 = int_to_ptr.vmem [resolvable:$true] %s22
      %28 = dma.hbm_to_vmem [thread:$0]  %s21, 256, %s23, [#allocation3], 128, 128, 8
    $region5: #{tpu_custom_call.1} parent=1 // pred_fallthru
      _
    // Predicated region
    $region6: #{tpu_custom_call.1} parent=1 // pred_check
      _
    $region7: #{tpu_custom_call.1} parent=1 // pred_check_branch
      %30 = sbr.rel (0) target = $region9
    $region8: #{tpu_custom_call.1} parent=1 // pred_region
      %s31 = sadd.s32 0, 0
      %p32 = scmp.lt.s32.totalorder %s31, 0
      %s33 = scalar_select %p32, %s31, 0
      %s34 = smul.u32 2, %s33
      %36 = vsyncadd [#allocation6], 0
      %s37 = smul.addr %s34, 8
      %s38 = scalar_lea.hbm %s1, %s37
      %s39 = sshll.u32 %s38, 4
      %s40 = int_to_ptr.hbm [resolvable:$true] %s39
      %s41 = sshll.u32 [#allocation5], 4
      %s42 = int_to_ptr.vmem [resolvable:$true] %s41
      %47 = dma.hbm_to_vmem [thread:$0]  %s40, 256, %s42, [#allocation6], 128, 128, 8
    $region9: #{tpu_custom_call.1} parent=1 // pred_fallthru
      _
    // Predicated region
    $region10: #{tpu_custom_call.1} parent=1 // pred_check
      _
    $region11: #{tpu_custom_call.1} parent=1 // pred_check_branch
      %49 = sbr.rel (0) target = $region13
    $region12: #{tpu_custom_call.1} parent=1 // pred_region
      %51 = dma.done [#allocation3], 256
    $region13: #{tpu_custom_call.1} parent=1 // pred_fallthru
      _
    // Predicated region
    $region14: #{tpu_custom_call.1} parent=1 // pred_check
      _
    $region15: #{tpu_custom_call.1} parent=1 // pred_check_branch
      %53 = sbr.rel (0) target = $region17
    $region16: #{tpu_custom_call.1} parent=1 // pred_region
      %55 = dma.done [#allocation6], 256
    $region17: #{tpu_custom_call.1} parent=1 // pred_fallthru
      _
    %s56 = sadd.s32 0, 0
    %p57 = scmp.lt.s32.totalorder %s56, 0
    %s58 = scalar_select %p57, %s56, 0
    %s59 = smul.u32 2, %s58
    %s60 = sadd.s32 0, 0
    %p61 = scmp.lt.s32.totalorder %s60, 0
    %s62 = scalar_select %p61, %s60, 0
    %s63 = smul.u32 2, %s62
    %p64 = scmp.eq.s32.totalorder 0, 0
    // Predicated region
    $region18: #{tpu_custom_call.1} parent=1 // pred_check
      %p65 = pneg %p64
    $region19: #{tpu_custom_call.1} parent=1 // pred_check_branch
      %67 = sbr.rel (%p65) target = $region21
    $region20: #{tpu_custom_call.1} parent=1 // pred_region
      %68 = vst [vmem:[#allocation7] sm:$0xff] 0.0
    $region21: #{tpu_custom_call.1} parent=1 // pred_fallthru
      _
    %v69 = vld [vmem:[#allocation2] sm:$0xff]
    %v70 = vld [vmem:[#allocation2 + $0x8] sm:$0xff]
    %v71 = vld [vmem:[#allocation5] sm:$0xff]
    %v72 = vld [vmem:[#allocation5 + $0x8] sm:$0xff]
    %v73 = vsub.f32 1.0, %v69
    %v74 = vsub.f32 1.0, %v70
    %v75 = vlog2.pop %v69
    %v76 = vmul.f32 %v75, 0.6931472
    %v77 = vlog2.pop %v70
    %v78 = vmul.f32 %v77, 0.6931472
    %v79 = vlog2.pop %v73
    %v80 = vmul.f32 %v79, 0.6931472
    %v81 = vlog2.pop %v74
    %v82 = vmul.f32 %v81, 0.6931472
    %v83 = vmul.f32 %v69, %v69
    %v84 = vmul.f32 %v70, %v70
    %v85 = vmul.f32 %v73, %v73
    %v86 = vmul.f32 %v74, %v74
    %v87 = vmul.f32 %v85, -0.6
    %v88 = vmul.f32 %v86, -0.6
    %v89 = vmul.f32 %v87, %v71
    %v90 = vmul.f32 %v88, %v72
    %v91 = vmul.f32 %v89, %v76
    %v92 = vmul.f32 %v90, %v78
    %v93 = vmul.f32 %v83, 0.4
    %v94 = vmul.f32 %v84, 0.4
    %v95 = vsub.f32 1.0, %v71
    %v96 = vsub.f32 1.0, %v72
    %v97 = vmul.f32 %v93, %v95
    %v98 = vmul.f32 %v94, %v96
    %v99 = vmul.f32 %v97, %v80
    %v100 = vmul.f32 %v98, %v82
    %v101 = vsub.f32 %v91, %v99
    %v102 = vsub.f32 %v92, %v100
    %v103 = vadd.f32 %v101, %v102
    %v104 = vadd.f32 %v103, 0.0
    %v105 = vld [vmem:[#allocation7] sm:$0xff]
    %v106 = vadd.f32 %v105, %v104
    %107 = vst [vmem:[#allocation7] sm:$0xff] %v106
    // Predicated region
    $region22: #{tpu_custom_call.1} parent=1 // pred_check
      _
    $region23: #{tpu_custom_call.1} parent=1 // pred_check_branch
      %109 = sbr.rel (0) target = $region25
    $region24: #{tpu_custom_call.1} parent=1 // pred_region
      %111 = vsyncadd [#allocation4], 0
      %s113 = sshll.u32 [#allocation7], 4
      %s114 = int_to_ptr.vmem [resolvable:$true] %s113
      %s115 = sshll.u32 %s2, 4
      %s116 = int_to_ptr.hbm [resolvable:$true] %s115
      %118 = dma.vmem_to_hbm [thread:$0]  %s114, 128, %s116, [#allocation4]
    $region25: #{tpu_custom_call.1} parent=1 // pred_fallthru
      _
    // Predicated region
    $region26: #{tpu_custom_call.1} parent=1 // pred_check
      _
    $region27: #{tpu_custom_call.1} parent=1 // pred_check_branch
      %120 = sbr.rel (0) target = $region29
    $region28: #{tpu_custom_call.1} parent=1 // pred_region
      %122 = dma.done [#allocation4], 128
    $region29: #{tpu_custom_call.1} parent=1 // pred_fallthru
      _
    %123 = vsyncpa [#allocation3], 1
    %124 = vsyncpa [#allocation6], 1
    %125 = vsyncpa [#allocation4], 1

</llo_original>
